<compile_context>
chip_gen: v6e
topology: v6e:2x2x1
jax: 0.10.0
libtpu: 0.0.40
codegen_flags: <defaults>
</compile_context>

<pallas_src>
import jax
import jax.numpy as jnp
from jax.experimental import pallas as pl
from jax.experimental.pallas import tpu as pltpu


def _round_up(x, m):
    return (x + m - 1) // m * m


def relnet_feat_kernel(x_ref, w1_ref, b1_ref, w2_ref, b2_ref, w3_ref, b3_ref, o_ref):
    # Three Linear+ReLU stages fused, all VMEM-resident for the current batch tile.
    # x and weights arrive as bf16 (MXU-native); bias-add and ReLU stay in f32 on the VPU.
    x = x_ref[...]
    h1 = jnp.dot(x, w1_ref[...], preferred_element_type=jnp.float32) + b1_ref[...]
    h1 = jnp.maximum(h1, 0.0)
    h2 = jnp.dot(h1.astype(jnp.bfloat16), w2_ref[...],
                 preferred_element_type=jnp.float32) + b2_ref[...]
    h2 = jnp.maximum(h2, 0.0)
    h3 = jnp.dot(h2.astype(jnp.bfloat16), w3_ref[...],
                 preferred_element_type=jnp.float32) + b3_ref[...]
    h3 = jnp.maximum(h3, 0.0)
    o_ref[...] = h3.astype(o_ref.dtype)


def relnet_feat(x, params, *, tile_m=512):
    """Fused fc1->relu->fc2->relu->fc3->relu.

    x: (N, input_size) float32.
    params: dict with w1,b1,w2,b2,w3,b3; weights stored (in_features, out_features)
    so the kernel computes x @ W + b (== nn.Linear's x @ W_pt.T + b).
    """
    n, in_size = x.shape
    w1, b1 = params["w1"], params["b1"]
    w2, b2 = params["w2"], params["b2"]
    w3, b3 = params["w3"], params["b3"]
    out_size = w3.shape[1]

    # --- lane-dense output: pad final feature dim to a multiple of 128.
    # Extra columns get zero weight/bias -> relu(0) == 0; they are sliced off below.
    out_pad = _round_up(out_size, 128)
    if out_pad != out_size:
        w3 = jnp.pad(w3, ((0, 0), (0, out_pad - out_size)))
        b3 = jnp.pad(b3, ((0, 0), (0, out_pad - out_size)))

    # --- bf16 operands for the MXU (accumulation forced to f32 in-kernel).
    xb = x.astype(jnp.bfloat16)      # halves HBM read traffic for the activations
    w1b = w1.astype(jnp.bfloat16)
    w2b = w2.astype(jnp.bfloat16)
    w3b = w3.astype(jnp.bfloat16)

    # --- batch tiling: choose tile count first, then a sublane-aligned tile size, so a
    # ragged batch only pads by a handful of rows instead of most of a tile.
    # Padded rows compute garbage but land in the padded output region only, which is
    # sliced off before returning.
    g = max(1, pl.cdiv(n, tile_m))
    tm = _round_up(pl.cdiv(n, g), 8)
    n_pad = g * tm
    if n_pad != n:
        xb = jnp.pad(xb, ((0, n_pad - n), (0, 0)))

    # VMEM footprint is tiny (weights << 1 MiB, x/out tiles a few hundred KiB even at
    # tile_m=1024), so the default scoped VMEM limit is plenty on v5e/v6e/v7x.
    out = pl.pallas_call(
        relnet_feat_kernel,
        out_shape=jax.ShapeDtypeStruct((n_pad, out_pad), x.dtype),
        grid_spec=pltpu.PrefetchScalarGridSpec(
            num_scalar_prefetch=0,
            grid=(g,),
            in_specs=[
                pl.BlockSpec((tm, in_size), lambda i: (i, 0)),   # x tile (bf16)
                pl.BlockSpec(w1b.shape, lambda i: (0, 0)),       # W1 (in, 64)      bf16
                pl.BlockSpec(b1.shape, lambda i: (0, 0)),        # b1 (1, 64)       f32
                pl.BlockSpec(w2b.shape, lambda i: (0, 0)),       # W2 (64, 128)     bf16
                pl.BlockSpec(b2.shape, lambda i: (0, 0)),        # b2 (1, 128)      f32
                pl.BlockSpec(w3b.shape, lambda i: (0, 0)),       # W3 (128, outP)   bf16
                pl.BlockSpec(b3.shape, lambda i: (0, 0)),        # b3 (1, outP)     f32
            ],
            out_specs=pl.BlockSpec((tm, out_pad), lambda i: (i, 0)),
        ),
        compiler_params=pltpu.CompilerParams(
            # Batch axis is independent -> shards across TensorCores (megacore / v7x).
            dimension_semantics=("parallel",),
        ),
    )(xb, w1b, b1, w2b, b2, w3b, b3)
    return out[:n, :out_size]


def init_params(key, input_size, output_size):
    """Deterministic synthetic init matching nn.Linear shapes (stored as (in, out))."""
    ks = jax.random.split(key, 6)

    def lin(kw, kb, fan_in, fan_out):
        bound = 1.0 / jnp.sqrt(fan_in)
        w = jax.random.uniform(kw, (fan_in, fan_out), jnp.float32, -bound, bound)
        b = jax.random.uniform(kb, (1, fan_out), jnp.float32, -bound, bound)
        return w, b

    w1, b1 = lin(ks[0], ks[1], input_size, 64)
    w2, b2 = lin(ks[2], ks[3], 64, 128)
    w3, b3 = lin(ks[4], ks[5], 128, output_size)
    return {"w1": w1, "b1": b1, "w2": w2, "b2": b2, "w3": w3, "b3": b3}


def relnet_feat_ref(x, p):
    # Pure-JAX f32 reference with the same (BN-dropping) semantics.
    h = jnp.maximum(x @ p["w1"] + p["b1"], 0.0)
    h = jnp.maximum(h @ p["w2"] + p["b2"], 0.0)
    h = jnp.maximum(h @ p["w3"] + p["b3"], 0.0)
    return h


if __name__ == "__main__":
    key = jax.random.PRNGKey(0)
    k_x, k_p = jax.random.split(key)

    batch = 300          # deliberately not a multiple of the tile -> exercises padding
    input_size = 16
    output_size = 32

    x = jax.random.normal(k_x, (batch, input_size), jnp.float32)
    params = init_params(k_p, input_size, output_size)

    out = relnet_feat(x, params, tile_m=256)   # g=2 -> tm=152, only 4 padded rows
    out = jax.block_until_ready(out)

    ref = relnet_feat_ref(x, params)
    assert out.shape == (batch, output_size)
    # Tolerance loosened vs. the f32 reference because MXU operands are bf16
    # (accumulation is still f32).
    assert jnp.allclose(out, ref, atol=3e-2, rtol=3e-2), "mismatch vs reference"

    print("KERNEL_OK")
</pallas_src>

<mosaic_0001>
module attributes {stable_mosaic.version = 11 : i64} {
  func.func @relnet_feat_kernel(%arg0: i32, %arg1: memref<152x16xbf16, #tpu.memory_space<vmem>>, %arg2: memref<16x64xbf16, #tpu.memory_space<vmem>>, %arg3: memref<1x64xf32, #tpu.memory_space<vmem>>, %arg4: memref<64x128xbf16, #tpu.memory_space<vmem>>, %arg5: memref<1x128xf32, #tpu.memory_space<vmem>>, %arg6: memref<128x128xbf16, #tpu.memory_space<vmem>>, %arg7: memref<1x128xf32, #tpu.memory_space<vmem>>, %arg8: memref<152x128xf32, #tpu.memory_space<vmem>>) attributes {dimension_semantics = [#tpu.dimension_semantics<parallel>], iteration_bounds = array<i64: 2>, scalar_prefetch = 0 : i64, scratch_operands = 0 : i64, tpu.core_type = #tpu.core_type<tc>, window_params = [{transform_indices = @transform_0, window_bounds = array<i64: 152, 16>}, {pipeline_mode = #tpu.pipeline_mode<synchronous>, transform_indices = @transform_1, window_bounds = array<i64: 16, 64>}, {pipeline_mode = #tpu.pipeline_mode<synchronous>, transform_indices = @transform_2, window_bounds = array<i64: 1, 64>}, {pipeline_mode = #tpu.pipeline_mode<synchronous>, transform_indices = @transform_3, window_bounds = array<i64: 64, 128>}, {pipeline_mode = #tpu.pipeline_mode<synchronous>, transform_indices = @transform_4, window_bounds = array<i64: 1, 128>}, {pipeline_mode = #tpu.pipeline_mode<synchronous>, transform_indices = @transform_5, window_bounds = array<i64: 128, 128>}, {pipeline_mode = #tpu.pipeline_mode<synchronous>, transform_indices = @transform_6, window_bounds = array<i64: 1, 128>}, {transform_indices = @transform_7, window_bounds = array<i64: 152, 128>}]} {
    %c0 = arith.constant 0 : index
    %c0_0 = arith.constant 0 : index
    %0 = vector.load %arg1[%c0, %c0_0] : memref<152x16xbf16, #tpu.memory_space<vmem>>, vector<152x16xbf16>
    %c0_1 = arith.constant 0 : index
    %c0_2 = arith.constant 0 : index
    %1 = vector.load %arg2[%c0_1, %c0_2] : memref<16x64xbf16, #tpu.memory_space<vmem>>, vector<16x64xbf16>
    %cst = arith.constant dense<0.000000e+00> : vector<152x64xf32>
    %2 = tpu.matmul %0, %1, %cst {dimension_numbers = #tpu.dot_dimension_numbers<[1], [0], [0], [1], [0, 0, 1, 1], [], []>} : vector<152x16xbf16>, vector<16x64xbf16>, vector<152x64xf32> -> vector<152x64xf32>
    %c0_3 = arith.constant 0 : index
    %c0_4 = arith.constant 0 : index
    %3 = vector.load %arg3[%c0_3, %c0_4] : memref<1x64xf32, #tpu.memory_space<vmem>>, vector<1x64xf32>
    %4 = vector.broadcast %3 : vector<1x64xf32> to vector<152x64xf32>
    %5 = arith.addf %2, %4 : vector<152x64xf32>
    %cst_5 = arith.constant 0.000000e+00 : f32
    %6 = vector.broadcast %cst_5 : f32 to vector<152x64xf32>
    %7 = arith.maximumf %5, %6 : vector<152x64xf32>
    %8 = arith.truncf %7 : vector<152x64xf32> to vector<152x64xbf16>
    %c0_6 = arith.constant 0 : index
    %c0_7 = arith.constant 0 : index
    %9 = vector.load %arg4[%c0_6, %c0_7] : memref<64x128xbf16, #tpu.memory_space<vmem>>, vector<64x128xbf16>
    %cst_8 = arith.constant dense<0.000000e+00> : vector<152x128xf32>
    %10 = tpu.matmul %8, %9, %cst_8 {dimension_numbers = #tpu.dot_dimension_numbers<[1], [0], [0], [1], [0, 0, 1, 1], [], []>} : vector<152x64xbf16>, vector<64x128xbf16>, vector<152x128xf32> -> vector<152x128xf32>
    %c0_9 = arith.constant 0 : index
    %c0_10 = arith.constant 0 : index
    %11 = vector.load %arg5[%c0_9, %c0_10] : memref<1x128xf32, #tpu.memory_space<vmem>>, vector<1x128xf32>
    %12 = vector.broadcast %11 : vector<1x128xf32> to vector<152x128xf32>
    %13 = arith.addf %10, %12 : vector<152x128xf32>
    %cst_11 = arith.constant 0.000000e+00 : f32
    %14 = vector.broadcast %cst_11 : f32 to vector<152x128xf32>
    %15 = arith.maximumf %13, %14 : vector<152x128xf32>
    %16 = arith.truncf %15 : vector<152x128xf32> to vector<152x128xbf16>
    %c0_12 = arith.constant 0 : index
    %c0_13 = arith.constant 0 : index
    %17 = vector.load %arg6[%c0_12, %c0_13] : memref<128x128xbf16, #tpu.memory_space<vmem>>, vector<128x128xbf16>
    %cst_14 = arith.constant dense<0.000000e+00> : vector<152x128xf32>
    %18 = tpu.matmul %16, %17, %cst_14 {dimension_numbers = #tpu.dot_dimension_numbers<[1], [0], [0], [1], [0, 0, 1, 1], [], []>} : vector<152x128xbf16>, vector<128x128xbf16>, vector<152x128xf32> -> vector<152x128xf32>
    %c0_15 = arith.constant 0 : index
    %c0_16 = arith.constant 0 : index
    %19 = vector.load %arg7[%c0_15, %c0_16] : memref<1x128xf32, #tpu.memory_space<vmem>>, vector<1x128xf32>
    %20 = vector.broadcast %19 : vector<1x128xf32> to vector<152x128xf32>
    %21 = arith.addf %18, %20 : vector<152x128xf32>
    %cst_17 = arith.constant 0.000000e+00 : f32
    %22 = vector.broadcast %cst_17 : f32 to vector<152x128xf32>
    %23 = arith.maximumf %21, %22 : vector<152x128xf32>
    %c0_18 = arith.constant 0 : index
    %c0_19 = arith.constant 0 : index
    %24 = vector.load %arg8[%c0_18, %c0_19] : memref<152x128xf32, #tpu.memory_space<vmem>>, vector<152x128xf32>
    tpu.vector_store %arg8[%c0_18, %c0_19], %23 {strides = array<i32>} : memref<152x128xf32, #tpu.memory_space<vmem>>, vector<152x128xf32>,
    return
  }
  func.func @transform_0(%arg0: i32) -> (i32, i32) {
    %c0_i32 = arith.constant 0 : i32
    %c0_i32_0 = arith.constant 0 : i32
    return %arg0, %c0_i32 : i32, i32
  }
  func.func @transform_1(%arg0: i32) -> (i32, i32) {
    %c0_i32 = arith.constant 0 : i32
    %c0_i32_0 = arith.constant 0 : i32
    %c0_i32_1 = arith.constant 0 : i32
    return %c0_i32, %c0_i32_0 : i32, i32
  }
  func.func @transform_2(%arg0: i32) -> (i32, i32) {
    %c0_i32 = arith.constant 0 : i32
    %c0_i32_0 = arith.constant 0 : i32
    %c0_i32_1 = arith.constant 0 : i32
    return %c0_i32, %c0_i32_0 : i32, i32
  }
  func.func @transform_3(%arg0: i32) -> (i32, i32) {
    %c0_i32 = arith.constant 0 : i32
    %c0_i32_0 = arith.constant 0 : i32
    %c0_i32_1 = arith.constant 0 : i32
    return %c0_i32, %c0_i32_0 : i32, i32
  }
  func.func @transform_4(%arg0: i32) -> (i32, i32) {
    %c0_i32 = arith.constant 0 : i32
    %c0_i32_0 = arith.constant 0 : i32
    %c0_i32_1 = arith.constant 0 : i32
    return %c0_i32, %c0_i32_0 : i32, i32
  }
  func.func @transform_5(%arg0: i32) -> (i32, i32) {
    %c0_i32 = arith.constant 0 : i32
    %c0_i32_0 = arith.constant 0 : i32
    %c0_i32_1 = arith.constant 0 : i32
    return %c0_i32, %c0_i32_0 : i32, i32
  }
  func.func @transform_6(%arg0: i32) -> (i32, i32) {
    %c0_i32 = arith.constant 0 : i32
    %c0_i32_0 = arith.constant 0 : i32
    %c0_i32_1 = arith.constant 0 : i32
    return %c0_i32, %c0_i32_0 : i32, i32
  }
  func.func @transform_7(%arg0: i32) -> (i32, i32) {
    %c0_i32 = arith.constant 0 : i32
    %c0_i32_0 = arith.constant 0 : i32
    return %arg0, %c0_i32 : i32, i32
  }
}

</mosaic_0001>

<llo_original>
// kernel: tpu_custom_call.1
$region0: #{tpu_custom_call.1}
  #allocation0 [shape = 'u32[]', space=smem, size = 0x4, offset = 0x4, fixed_abs, tag = 'smem constant byte address 0x4 - core index']
  #allocation1 [shape = 'u32[144,128]{1,0:T(1,128)}', space=vmem, size = 0x12000, scoped, tag = 'internal scratch']
  %s0 = inlined_call_operand.vmem [shape: bf16[304,16], index: 0, kind: input, shape index: {}]
  %s1 = inlined_call_operand.vmem [shape: bf16[16,64], index: 1, kind: input, shape index: {}]
  %s2 = inlined_call_operand.vmem [shape: f32[1,64], index: 2, kind: input, shape index: {}]
  %s3 = inlined_call_operand.vmem [shape: bf16[64,128], index: 3, kind: input, shape index: {}]
  %s4 = inlined_call_operand.vmem [shape: f32[1,128], index: 4, kind: input, shape index: {}]
  %s5 = inlined_call_operand.vmem [shape: bf16[128,128], index: 5, kind: input, shape index: {}]
  %s6 = inlined_call_operand.vmem [shape: f32[1,128], index: 6, kind: input, shape index: {}]
  %s7 = inlined_call_operand.hbm [shape: f32[304,128], index: 7, kind: output, shape index: {}]
  %s8 = sld [smem:[#allocation0]]
  $region61: #{tpu_custom_call.1} parent=0
    _
  %s10 = ssub.s32 1, %s8
  %s11 = scalar_select 0, %s10, %s8
  $region1: #{tpu_custom_call.1} parent=0
    #allocation2 [shape = 'u8[155648]{0}', space=vmem, size = 0x26000, scoped, tag = 'output window, operand 0']
    #allocation3 [shape = 's32[2]{0}', space=sflag, size = 0x8, scoped, tag = 'scoped memory for tpu_custom_call.1']
    %12 = vsyncpa [#allocation3], 0
    %s13 = scalar_lea.sflag [#allocation3], 1
    %14 = vsyncpa %s13, 0
    loop: start=0, step=1, limit=4
    $region2: #{tpu_custom_call.1} parent=1 // loop_pre_header
      _
    $region3: #{tpu_custom_call.1} parent=1 // loop_header
      %s16 = sphi 0, %s20
      %p17 = scmp.ge.s32.totalorder %s16, 4
      %s26 = sphi 0, %s28
      %s29 = sphi 0, %s26
      %s30 = sphi 0, %s29
      %s46 = sphi 0, %s30
      %s50 = sphi 0, %s50
      %s52 = sphi 0, %s50
      %s53 = sphi 0, %s52
      %s67 = sphi 0, %s53
      %s71 = sphi 0, %s71
      %s73 = sphi 0, %s71
      %s74 = sphi 0, %s73
      %s88 = sphi 0, %s74
      %s92 = sphi 0, %s92
      %s94 = sphi 0, %s92
      %s95 = sphi 0, %s94
      %s109 = sphi 0, %s95
      %s113 = sphi 0, %s113
      %s115 = sphi 0, %s113
      %s116 = sphi 0, %s115
      %s130 = sphi 0, %s116
      %s134 = sphi 0, %s134
      %s136 = sphi 0, %s134
      %s137 = sphi 0, %s136
      %s151 = sphi 0, %s137
      %s155 = sphi 0, %s155
      %s157 = sphi 0, %s155
      %s158 = sphi 0, %s157
      %s172 = sphi 0, %s158
      %s178 = sphi 0, %s180
      %s181 = sphi 0, %s178
      %s182 = sphi 0, %s181
      %s198 = sphi 0, %s182
    $region4: #{tpu_custom_call.1} parent=1 // loop_header_branch
      %19 = sbr.rel (%p17) target = $region8
    $region5: #{tpu_custom_call.1} parent=1 // loop_body
      %s21 = ssub.s32 %s16, 1
      %s22 = ssub.s32 %s16, 2
      %s23 = sadd.s32 %s16, 1
      %s24 = ssub.s32 %s16, %s23
      %p25 = scmp.eq.s32.totalorder %s24, 0
      %s27 = sadd.s32 %s26, 1
      %s28 = scalar_select %p25, %s26, %s27
      %p31 = pneg %p25
      %p32 = scmp.eq.s32.totalorder %s16, 1
      %p33 = por %p31, %p32
      %p34 = scmp.ne.s32.totalorder %s26, %s29
      %p35 = scmp.eq.s32.totalorder %s16, 0
      %p36 = por %p34, %p35
      %p37 = scmp.ne.s32.totalorder %s26, %s29
      %p38 = scmp.eq.s32.totalorder %s21, 1
      %p39 = por %p37, %p38
      %p40 = scmp.ne.s32.totalorder %s29, %s30
      %p41 = scmp.eq.s32.totalorder %s21, 0
      %p42 = por %p40, %p41
      %p43 = scmp.ne.s32.totalorder %s29, %s30
      %p44 = scmp.eq.s32.totalorder %s22, 1
      %p45 = por %p43, %p44
      %p47 = scmp.ne.s32.totalorder %s30, %s46
      %p48 = scmp.eq.s32.totalorder %s22, 0
      %p49 = por %p47, %p48
      %s51 = sadd.s32 %s50, 1
      %p54 = scmp.eq.s32.totalorder %s16, 1
      %p55 = scmp.ne.s32.totalorder %s50, %s52
      %p56 = scmp.eq.s32.totalorder %s16, 0
      %p57 = por %p55, %p56
      %p58 = scmp.ne.s32.totalorder %s50, %s52
      %p59 = scmp.eq.s32.totalorder %s21, 1
      %p60 = por %p58, %p59
      %p61 = scmp.ne.s32.totalorder %s52, %s53
      %p62 = scmp.eq.s32.totalorder %s21, 0
      %p63 = por %p61, %p62
      %p64 = scmp.ne.s32.totalorder %s52, %s53
      %p65 = scmp.eq.s32.totalorder %s22, 1
      %p66 = por %p64, %p65
      %p68 = scmp.ne.s32.totalorder %s53, %s67
      %p69 = scmp.eq.s32.totalorder %s22, 0
      %p70 = por %p68, %p69
      %s72 = sadd.s32 %s71, 1
      %p75 = scmp.eq.s32.totalorder %s16, 1
      %p76 = scmp.ne.s32.totalorder %s71, %s73
      %p77 = scmp.eq.s32.totalorder %s16, 0
      %p78 = por %p76, %p77
      %p79 = scmp.ne.s32.totalorder %s71, %s73
      %p80 = scmp.eq.s32.totalorder %s21, 1
      %p81 = por %p79, %p80
      %p82 = scmp.ne.s32.totalorder %s73, %s74
      %p83 = scmp.eq.s32.totalorder %s21, 0
      %p84 = por %p82, %p83
      %p85 = scmp.ne.s32.totalorder %s73, %s74
      %p86 = scmp.eq.s32.totalorder %s22, 1
      %p87 = por %p85, %p86
      %p89 = scmp.ne.s32.totalorder %s74, %s88
      %p90 = scmp.eq.s32.totalorder %s22, 0
      %p91 = por %p89, %p90
      %s93 = sadd.s32 %s92, 1
      %p96 = scmp.eq.s32.totalorder %s16, 1
      %p97 = scmp.ne.s32.totalorder %s92, %s94
      %p98 = scmp.eq.s32.totalorder %s16, 0
      %p99 = por %p97, %p98
      %p100 = scmp.ne.s32.totalorder %s92, %s94
      %p101 = scmp.eq.s32.totalorder %s21, 1
      %p102 = por %p100, %p101
      %p103 = scmp.ne.s32.totalorder %s94, %s95
      %p104 = scmp.eq.s32.totalorder %s21, 0
      %p105 = por %p103, %p104
      %p106 = scmp.ne.s32.totalorder %s94, %s95
      %p107 = scmp.eq.s32.totalorder %s22, 1
      %p108 = por %p106, %p107
      %p110 = scmp.ne.s32.totalorder %s95, %s109
      %p111 = scmp.eq.s32.totalorder %s22, 0
      %p112 = por %p110, %p111
      %s114 = sadd.s32 %s113, 1
      %p117 = scmp.eq.s32.totalorder %s16, 1
      %p118 = scmp.ne.s32.totalorder %s113, %s115
      %p119 = scmp.eq.s32.totalorder %s16, 0
      %p120 = por %p118, %p119
      %p121 = scmp.ne.s32.totalorder %s113, %s115
      %p122 = scmp.eq.s32.totalorder %s21, 1
      %p123 = por %p121, %p122
      %p124 = scmp.ne.s32.totalorder %s115, %s116
      %p125 = scmp.eq.s32.totalorder %s21, 0
      %p126 = por %p124, %p125
      %p127 = scmp.ne.s32.totalorder %s115, %s116
      %p128 = scmp.eq.s32.totalorder %s22, 1
      %p129 = por %p127, %p128
      %p131 = scmp.ne.s32.totalorder %s116, %s130
      %p132 = scmp.eq.s32.totalorder %s22, 0
      %p133 = por %p131, %p132
      %s135 = sadd.s32 %s134, 1
      %p138 = scmp.eq.s32.totalorder %s16, 1
      %p139 = scmp.ne.s32.totalorder %s134, %s136
      %p140 = scmp.eq.s32.totalorder %s16, 0
      %p141 = por %p139, %p140
      %p142 = scmp.ne.s32.totalorder %s134, %s136
      %p143 = scmp.eq.s32.totalorder %s21, 1
      %p144 = por %p142, %p143
      %p145 = scmp.ne.s32.totalorder %s136, %s137
      %p146 = scmp.eq.s32.totalorder %s21, 0
      %p147 = por %p145, %p146
      %p148 = scmp.ne.s32.totalorder %s136, %s137
      %p149 = scmp.eq.s32.totalorder %s22, 1
      %p150 = por %p148, %p149
      %p152 = scmp.ne.s32.totalorder %s137, %s151
      %p153 = scmp.eq.s32.totalorder %s22, 0
      %p154 = por %p152, %p153
      %s156 = sadd.s32 %s155, 1
      %p159 = scmp.eq.s32.totalorder %s16, 1
      %p160 = scmp.ne.s32.totalorder %s155, %s157
      %p161 = scmp.eq.s32.totalorder %s16, 0
      %p162 = por %p160, %p161
      %p163 = scmp.ne.s32.totalorder %s155, %s157
      %p164 = scmp.eq.s32.totalorder %s21, 1
      %p165 = por %p163, %p164
      %p166 = scmp.ne.s32.totalorder %s157, %s158
      %p167 = scmp.eq.s32.totalorder %s21, 0
      %p168 = por %p166, %p167
      %p169 = scmp.ne.s32.totalorder %s157, %s158
      %p170 = scmp.eq.s32.totalorder %s22, 1
      %p171 = por %p169, %p170
      %p173 = scmp.ne.s32.totalorder %s158, %s172
      %p174 = scmp.eq.s32.totalorder %s22, 0
      %p175 = por %p173, %p174
      %s176 = ssub.s32 %s16, %s23
      %p177 = scmp.eq.s32.totalorder %s176, 0
      %s179 = sadd.s32 %s178, 1
      %s180 = scalar_select %p177, %s178, %s179
      %p183 = pneg %p177
      %p184 = scmp.eq.s32.totalorder %s16, 1
      %p185 = por %p183, %p184
      %p186 = scmp.ne.s32.totalorder %s178, %s181
      %p187 = scmp.eq.s32.totalorder %s16, 0
      %p188 = por %p186, %p187
      %p189 = scmp.ne.s32.totalorder %s178, %s181
      %p190 = scmp.eq.s32.totalorder %s21, 1
      %p191 = por %p189, %p190
      %p192 = scmp.ne.s32.totalorder %s181, %s182
      %p193 = scmp.eq.s32.totalorder %s21, 0
      %p194 = por %p192, %p193
      %p195 = scmp.ne.s32.totalorder %s181, %s182
      %p196 = scmp.eq.s32.totalorder %s22, 1
      %p197 = por %p195, %p196
      %p199 = scmp.ne.s32.totalorder %s182, %s198
      %p200 = scmp.eq.s32.totalorder %s22, 0
      %p201 = por %p199, %p200
      %p202 = scmp.le.s32.totalorder 1, %s16
      %p203 = scmp.lt.s32.totalorder %s16, 3
      %p204 = pnand %p202, %p203
      %p205 = pneg %p204
      // Predicated region
      $region9: #{tpu_custom_call.1} parent=5 // pred_check
        _
      $region10: #{tpu_custom_call.1} parent=5 // pred_check_branch
        %207 = sbr.rel (%p204) target = $region12
      $region11: #{tpu_custom_call.1} parent=5 // pred_region
        %s208 = ssub.s32 %s16, 1
        // Predicated region
        $region13: #{tpu_custom_call.1} parent=11 // pred_check
          %p209 = pneg %p63
        $region14: #{tpu_custom_call.1} parent=11 // pred_check_branch
          %211 = sbr.rel (%p209) target = $region16
        $region15: #{tpu_custom_call.1} parent=11 // pred_region
          _
        $region16: #{tpu_custom_call.1} parent=11 // pred_fallthru
          _
        // Predicated region
        $region17: #{tpu_custom_call.1} parent=11 // pred_check
          %p212 = pneg %p84
        $region18: #{tpu_custom_call.1} parent=11 // pred_check_branch
          %214 = sbr.rel (%p212) target = $region20
        $region19: #{tpu_custom_call.1} parent=11 // pred_region
          _
        $region20: #{tpu_custom_call.1} parent=11 // pred_fallthru
          _
        // Predicated region
        $region21: #{tpu_custom_call.1} parent=11 // pred_check
          %p215 = pneg %p105
        $region22: #{tpu_custom_call.1} parent=11 // pred_check_branch
          %217 = sbr.rel (%p215) target = $region24
        $region23: #{tpu_custom_call.1} parent=11 // pred_region
          _
        $region24: #{tpu_custom_call.1} parent=11 // pred_fallthru
          _
        // Predicated region
        $region25: #{tpu_custom_call.1} parent=11 // pred_check
          %p218 = pneg %p126
        $region26: #{tpu_custom_call.1} parent=11 // pred_check_branch
          %220 = sbr.rel (%p218) target = $region28
        $region27: #{tpu_custom_call.1} parent=11 // pred_region
          _
        $region28: #{tpu_custom_call.1} parent=11 // pred_fallthru
          _
        // Predicated region
        $region29: #{tpu_custom_call.1} parent=11 // pred_check
          %p221 = pneg %p147
        $region30: #{tpu_custom_call.1} parent=11 // pred_check_branch
          %223 = sbr.rel (%p221) target = $region32
        $region31: #{tpu_custom_call.1} parent=11 // pred_region
          _
        $region32: #{tpu_custom_call.1} parent=11 // pred_fallthru
          _
        // Predicated region
        $region33: #{tpu_custom_call.1} parent=11 // pred_check
          %p224 = pneg %p168
        $region34: #{tpu_custom_call.1} parent=11 // pred_check_branch
          %226 = sbr.rel (%p224) target = $region36
        $region35: #{tpu_custom_call.1} parent=11 // pred_region
          _
        $region36: #{tpu_custom_call.1} parent=11 // pred_fallthru
          _
      $region12: #{tpu_custom_call.1} parent=5 // pred_fallthru
        _
      %p227 = scmp.lt.s32.totalorder %s16, 2
      // Predicated region
      $region37: #{tpu_custom_call.1} parent=5 // pred_check
        %p228 = pneg %p227
      $region38: #{tpu_custom_call.1} parent=5 // pred_check_branch
        %230 = sbr.rel (%p228) target = $region40
      $region39: #{tpu_custom_call.1} parent=5 // pred_region
        // Predicated region
        $region41: #{tpu_custom_call.1} parent=39 // pred_check
          %p231 = pneg %p36
        $region42: #{tpu_custom_call.1} parent=39 // pred_check_branch
          %233 = sbr.rel (%p231) target = $region44
        $region43: #{tpu_custom_call.1} parent=39 // pred_region
          %s234 = smul.u32 19, %s16
          %p235 = scmp.lt.s32.totalorder %s234, 37
          %s236 = scalar_select %p235, %s234, 37
          %s237 = smul.addr %s236, 4
          %s238 = scalar_lea.vmem %s0, %s237
          %s239 = smul.u32 19, %s16
        $region44: #{tpu_custom_call.1} parent=39 // pred_fallthru
          _
      $region40: #{tpu_custom_call.1} parent=5 // pred_fallthru
        _
      %p240 = scmp.le.s32.totalorder 1, %s16
      %p241 = scmp.lt.s32.totalorder %s16, 3
      %p242 = pnand %p240, %p241
      %p243 = pneg %p242
      // Predicated region
      $region45: #{tpu_custom_call.1} parent=5 // pred_check
        _
      $region46: #{tpu_custom_call.1} parent=5 // pred_check_branch
        %245 = sbr.rel (%p242) target = $region48
      $region47: #{tpu_custom_call.1} parent=5 // pred_region
        %s246 = ssub.s32 %s16, 1
        %s247 = smul.u32 19, %s21
        %p248 = scmp.lt.s32.totalorder %s247, 37
        %s249 = scalar_select %p248, %s247, 37
        %s250 = smul.addr %s249, 4
        %s251 = scalar_lea.vmem %s0, %s250
        %p252 = pneg %p42
        %p253 = pneg %p39
        %p254 = pneg %p63
        %p255 = pneg %p60
        %p256 = pneg %p84
        %p257 = pneg %p81
        %p258 = pneg %p105
        %p259 = pneg %p102
        %p260 = pneg %p126
        %p261 = pneg %p123
        %p262 = pneg %p147
        %p263 = pneg %p144
        %p264 = pneg %p168
        %p265 = pneg %p165
        %p266 = pneg %p194
        %p267 = pneg %p191
        %s268 = sand.u32 %s181, 1
        %s269 = scalar_lea.sflag [#allocation3], %s268
        %s270 = sand.u32 %s181, 1
        %s271 = smul.addr %s270, 152
        %s272 = scalar_lea.vmem [#allocation2], %s271
        %s273 = smul.u32 19, %s21
        %p274 = scmp.lt.s32.totalorder %s273, 37
        %s275 = scalar_select %p274, %s273, 37
        %s276 = smul.addr %s275, 4
        %s277 = scalar_lea.vmem %s0, %s276
        %s278 = smul.u32 19, %s21
        %s279 = smul.u32 19, %s21
        %v281 = vld [vmem:[%s277] sm:$0xf]
        %v282 = vld [vmem:[%s277 + $0x4] sm:$0xf]
        %v283 = vld [vmem:[%s277 + $0x8] sm:$0xf]
        %v284 = vld [vmem:[%s277 + $0xc] sm:$0xf]
        %v285 = vld [vmem:[%s277 + $0x10] sm:$0xf]
        %v286 = vld [vmem:[%s277 + $0x14] sm:$0xf]
        %v287 = vld [vmem:[%s277 + $0x18] sm:$0xf]
        %v288 = vld [vmem:[%s277 + $0x1c] sm:$0xf]
        %v289 = vld [vmem:[%s277 + $0x20] sm:$0xf]
        %v290 = vld [vmem:[%s277 + $0x24] sm:$0xf]
        %v291 = vld [vmem:[%s277 + $0x28] sm:$0xf]
        %v292 = vld [vmem:[%s277 + $0x2c] sm:$0xf]
        %v293 = vld [vmem:[%s277 + $0x30] sm:$0xf]
        %v294 = vld [vmem:[%s277 + $0x34] sm:$0xf]
        %v295 = vld [vmem:[%s277 + $0x38] sm:$0xf]
        %v296 = vld [vmem:[%s277 + $0x3c] sm:$0xf]
        %v297 = vld [vmem:[%s277 + $0x40] sm:$0xf]
        %v298 = vld [vmem:[%s277 + $0x44] sm:$0xf]
        %v299 = vld [vmem:[%s277 + $0x48] sm:$0xf]
        %v300 = vld [vmem:[%s1] sm:$0xf]
        %v301 = vld [vmem:[%s1 + $0x4] sm:$0xf]
        %v302 = vld [vmem:[%s2] sm:$0x1]
        %v304 = vlaneseq
        %v305 = vshrl.u32 %v304, 7
        %v306 = vsub.s32 0, %v305
        %v307 = vrot.slane %v302, %v306
        %v328 = vunpack.c.l.b16 %v281
        %v329 = vunpack.c.l.b16 %v282
        %v330 = vunpack.c.l.b16 %v283
        %v331 = vunpack.c.l.b16 %v284
        %v332 = vunpack.c.l.b16 %v285
        %v333 = vunpack.c.l.b16 %v286
        %v334 = vunpack.c.l.b16 %v287
        %v335 = vunpack.c.l.b16 %v288
        %v336 = vunpack.c.l.b16 %v289
        %v337 = vunpack.c.l.b16 %v290
        %v338 = vunpack.c.l.b16 %v291
        %v339 = vunpack.c.l.b16 %v292
        %v340 = vunpack.c.l.b16 %v293
        %v341 = vunpack.c.l.b16 %v294
        %v342 = vunpack.c.l.b16 %v295
        %v343 = vunpack.c.l.b16 %v296
        %v344 = vunpack.c.l.b16 %v297
        %v345 = vunpack.c.l.b16 %v298
        %v346 = vunpack.c.l.b16 %v299
        %v347 = vpack.c.b16 %v329, %v328
        %v348 = vpack.c.b16 %v331, %v330
        %v349 = vpack.c.b16 %v333, %v332
        %v350 = vpack.c.b16 %v335, %v334
        %v351 = vpack.c.b16 %v337, %v336
        %v352 = vpack.c.b16 %v339, %v338
        %v353 = vpack.c.b16 %v341, %v340
        %v354 = vpack.c.b16 %v343, %v342
        %v355 = vpack.c.b16 %v345, %v344
        %v356 = vpack.c.b16 %v346, %v346
        %v359 = vunpack.c.l.b16 %v300
        %v360 = vunpack.c.l.b16 %v301
        %v361 = vpack.c.b16 %v360, %v359
        %vm363 = vcmask 130048
        %v365 = vsel %vm363, %v347, 0
        %v368 = vsel %vm363, %v348, 0
        %v371 = vsel %vm363, %v349, 0
        %v374 = vsel %vm363, %v350, 0
        %v377 = vsel %vm363, %v351, 0
        %v380 = vsel %vm363, %v352, 0
        %v383 = vsel %vm363, %v353, 0
        %v386 = vsel %vm363, %v354, 0
        %v389 = vsel %vm363, %v355, 0
        %v392 = vsel %vm363, %v356, 0
        %394 = vmatprep.subr.bf16.mxu0 0
        %395 = vmatpush1.bf16.msra.mxu0 0
        %396 = vmatprep.subr.bf16.mxu0 0
        %397 = vmatpush1.bf16.msra.mxu0 0
        %398 = vmatprep.subr.bf16.mxu0 0
        %399 = vmatpush1.bf16.msra.mxu0 0
        %400 = vmatprep.subr.bf16.mxu0 0
        %401 = vmatpush1.bf16.msra.mxu0 0
        %402 = vmatprep.subr.bf16.mxu0 0
        %403 = vmatpush1.bf16.msra.mxu0 0
        %404 = vmatprep.subr.bf16.mxu0 0
        %405 = vmatpush1.bf16.msra.mxu0 0
        %406 = vmatprep.subr.bf16.mxu0 0
        %407 = vmatpush1.bf16.msra.mxu0 0
        %408 = vmatprep.subr.bf16.mxu0 0
        %409 = vmatpush1.bf16.msra.mxu0 %v361
        %410 = vmatprep.subr.bf16.mxu0 0
        %411 = vmatpush2.bf16.msra.mxu0 0
        %412 = vmatprep.subr.bf16.mxu0 0
        %413 = vmatpush2.bf16.msra.mxu0 0
        %414 = vmatprep.subr.bf16.mxu0 0
        %415 = vmatpush2.bf16.msra.mxu0 0
        %416 = vmatprep.subr.bf16.mxu0 0
        %417 = vmatpush2.bf16.msra.mxu0 0
        %418 = vmatprep.subr.bf16.mxu0 0
        %419 = vmatpush2.bf16.msra.mxu0 0
        %420 = vmatprep.subr.bf16.mxu0 0
        %421 = vmatpush2.bf16.msra.mxu0 0
        %422 = vmatprep.subr.bf16.mxu0 0
        %423 = vmatpush2.bf16.msra.mxu0 0
        %424 = vmatprep.subr.bf16.mxu0 0
        %425 = vmatpush2.bf16.msra.mxu0 0
        %426 = vmatprep.mubr.bf16.mxu0 0
        %427 = vmatmul.mubr.bf16.gmra.mxu0 %v365
        %v428 = vpop.f32.mrf.mxu0
        %v429 = vadd.f32 %v307, %v428
        %v430 = vpop.f32.mrf.mxu0
        %v431 = vpop.f32.mrf.mxu0
        %v432 = vadd.f32 %v307, %v431
        %v433 = vpop.f32.mrf.mxu0
        %434 = vmatprep.mubr.bf16.mxu0 0
        %435 = vmatmul.mubr.bf16.gmra.mxu0 %v368
        %v436 = vpop.f32.mrf.mxu0
        %v437 = vadd.f32 %v307, %v436
        %v438 = vpop.f32.mrf.mxu0
        %v439 = vpop.f32.mrf.mxu0
        %v440 = vadd.f32 %v307, %v439
        %v441 = vpop.f32.mrf.mxu0
        %442 = vmatprep.mubr.bf16.mxu0 0
        %443 = vmatmul.mubr.bf16.gmra.mxu0 %v371
        %v444 = vpop.f32.mrf.mxu0
        %v445 = vadd.f32 %v307, %v444
        %v446 = vpop.f32.mrf.mxu0
        %v447 = vpop.f32.mrf.mxu0
        %v448 = vadd.f32 %v307, %v447
        %v449 = vpop.f32.mrf.mxu0
        %450 = vmatprep.mubr.bf16.mxu0 0
        %451 = vmatmul.mubr.bf16.gmra.mxu0 %v374
        %v452 = vpop.f32.mrf.mxu0
        %v453 = vadd.f32 %v307, %v452
        %v454 = vpop.f32.mrf.mxu0
        %v455 = vpop.f32.mrf.mxu0
        %v456 = vadd.f32 %v307, %v455
        %v457 = vpop.f32.mrf.mxu0
        %458 = vmatprep.mubr.bf16.mxu0 0
        %459 = vmatmul.mubr.bf16.gmra.mxu0 %v377
        %v460 = vpop.f32.mrf.mxu0
        %v461 = vadd.f32 %v307, %v460
        %v462 = vpop.f32.mrf.mxu0
        %v463 = vpop.f32.mrf.mxu0
        %v464 = vadd.f32 %v307, %v463
        %v465 = vpop.f32.mrf.mxu0
        %466 = vmatprep.mubr.bf16.mxu0 0
        %467 = vmatmul.mubr.bf16.gmra.mxu0 %v380
        %v468 = vpop.f32.mrf.mxu0
        %v469 = vadd.f32 %v307, %v468
        %v470 = vpop.f32.mrf.mxu0
        %v471 = vpop.f32.mrf.mxu0
        %v472 = vadd.f32 %v307, %v471
        %v473 = vpop.f32.mrf.mxu0
        %474 = vmatprep.mubr.bf16.mxu0 0
        %475 = vmatmul.mubr.bf16.gmra.mxu0 %v383
        %v476 = vpop.f32.mrf.mxu0
        %v477 = vadd.f32 %v307, %v476
        %v478 = vpop.f32.mrf.mxu0
        %v479 = vpop.f32.mrf.mxu0
        %v480 = vadd.f32 %v307, %v479
        %v481 = vpop.f32.mrf.mxu0
        %482 = vmatprep.mubr.bf16.mxu0 0
        %483 = vmatmul.mubr.bf16.gmra.mxu0 %v386
        %v484 = vpop.f32.mrf.mxu0
        %v485 = vadd.f32 %v307, %v484
        %v486 = vpop.f32.mrf.mxu0
        %v487 = vpop.f32.mrf.mxu0
        %v488 = vadd.f32 %v307, %v487
        %v489 = vpop.f32.mrf.mxu0
        %490 = vmatprep.mubr.bf16.mxu0 0
        %491 = vmatmul.mubr.bf16.gmra.mxu0 %v389
        %v492 = vpop.f32.mrf.mxu0
        %v493 = vadd.f32 %v307, %v492
        %v494 = vpop.f32.mrf.mxu0
        %v495 = vpop.f32.mrf.mxu0
        %v496 = vadd.f32 %v307, %v495
        %v497 = vpop.f32.mrf.mxu0
        %498 = vmatprep.mubr.bf16.mxu0 0
        %499 = vmatmul.mubr.bf16.gmra.mxu0 %v392
        %v500 = vpop.f32.mrf.mxu0
        %v501 = vadd.f32 %v307, %v500
        %v502 = vpop.f32.mrf.mxu0
        %v503 = vpop.f32.mrf.mxu0
        %v504 = vpop.f32.mrf.mxu0
        %505 = vdwg.mxu0
        %v506 = vmax.f32 %v429, 0.0
        %v507 = vmax.f32 %v432, 0.0
        %v508 = vmax.f32 %v437, 0.0
        %v509 = vmax.f32 %v440, 0.0
        %v510 = vmax.f32 %v445, 0.0
        %v511 = vmax.f32 %v448, 0.0
        %v512 = vmax.f32 %v453, 0.0
        %v513 = vmax.f32 %v456, 0.0
        %v514 = vmax.f32 %v461, 0.0
        %v515 = vmax.f32 %v464, 0.0
        %v516 = vmax.f32 %v469, 0.0
        %v517 = vmax.f32 %v472, 0.0
        %v518 = vmax.f32 %v477, 0.0
        %v519 = vmax.f32 %v480, 0.0
        %v520 = vmax.f32 %v485, 0.0
        %v521 = vmax.f32 %v488, 0.0
        %v522 = vmax.f32 %v493, 0.0
        %v523 = vmax.f32 %v496, 0.0
        %v524 = vmax.f32 %v501, 0.0
        %v525 = vpack.c.bf16 %v507, %v506
        %v526 = vpack.c.bf16 %v509, %v508
        %v527 = vpack.c.bf16 %v511, %v510
        %v528 = vpack.c.bf16 %v513, %v512
        %v529 = vpack.c.bf16 %v515, %v514
        %v530 = vpack.c.bf16 %v517, %v516
        %v531 = vpack.c.bf16 %v519, %v518
        %v532 = vpack.c.bf16 %v521, %v520
        %v533 = vpack.c.bf16 %v523, %v522
        %v534 = vpack.c.bf16 %v524, %v524
        %v535 = vld [vmem:[%s3] sm:$0xf]
        %v536 = vld [vmem:[%s3 + $0x4] sm:$0xf]
        %v537 = vld [vmem:[%s3 + $0x8] sm:$0xf]
        %v538 = vld [vmem:[%s3 + $0xc] sm:$0xf]
        %v539 = vld [vmem:[%s3 + $0x10] sm:$0xf]
        %v540 = vld [vmem:[%s3 + $0x14] sm:$0xf]
        %v541 = vld [vmem:[%s3 + $0x18] sm:$0xf]
        %v542 = vld [vmem:[%s3 + $0x1c] sm:$0xf]
        %v543 = vld [vmem:[%s4] sm:$0x1]
        %v545 = vlaneseq
        %v546 = vshrl.u32 %v545, 7
        %v547 = vsub.s32 0, %v546
        %v548 = vrot.slane %v543, %v547
        %v558 = vunpack.c.l.b16 %v535
        %v559 = vunpack.c.l.b16 %v536
        %v560 = vunpack.c.l.b16 %v537
        %v561 = vunpack.c.l.b16 %v538
        %v562 = vunpack.c.l.b16 %v539
        %v563 = vunpack.c.l.b16 %v540
        %v564 = vunpack.c.l.b16 %v541
        %v565 = vunpack.c.l.b16 %v542
        %v566 = vpack.c.b16 %v559, %v558
        %v567 = vpack.c.b16 %v561, %v560
        %v568 = vpack.c.b16 %v563, %v562
        %v569 = vpack.c.b16 %v565, %v564
        %vm574 = vcmask 523264
        %v576 = vsel %vm574, %v525, 0
        %v579 = vsel %vm574, %v526, 0
        %v582 = vsel %vm574, %v527, 0
        %v585 = vsel %vm574, %v528, 0
        %v588 = vsel %vm574, %v529, 0
        %v591 = vsel %vm574, %v530, 0
        %v594 = vsel %vm574, %v531, 0
        %v597 = vsel %vm574, %v532, 0
        %v600 = vsel %vm574, %v533, 0
        %v603 = vsel %vm574, %v534, 0
        %605 = vmatprep.subr.bf16.mxu0 0
        %606 = vmatpush1.bf16.msra.mxu0 0
        %607 = vmatprep.subr.bf16.mxu0 0
        %608 = vmatpush1.bf16.msra.mxu0 0
        %609 = vmatprep.subr.bf16.mxu0 0
        %610 = vmatpush1.bf16.msra.mxu0 0
        %611 = vmatprep.subr.bf16.mxu0 0
        %612 = vmatpush1.bf16.msra.mxu0 0
        %613 = vmatprep.subr.bf16.mxu0 0
        %614 = vmatpush1.bf16.msra.mxu0 %v569
        %615 = vmatprep.subr.bf16.mxu0 0
        %616 = vmatpush1.bf16.msra.mxu0 %v568
        %617 = vmatprep.subr.bf16.mxu0 0
        %618 = vmatpush1.bf16.msra.mxu0 %v567
        %619 = vmatprep.subr.bf16.mxu0 0
        %620 = vmatpush1.bf16.msra.mxu0 %v566
        %621 = vmatprep.subr.bf16.mxu0 0
        %622 = vmatpush2.bf16.msra.mxu0 0
        %623 = vmatprep.subr.bf16.mxu0 0
        %624 = vmatpush2.bf16.msra.mxu0 0
        %625 = vmatprep.subr.bf16.mxu0 0
        %626 = vmatpush2.bf16.msra.mxu0 0
        %627 = vmatprep.subr.bf16.mxu0 0
        %628 = vmatpush2.bf16.msra.mxu0 0
        %629 = vmatprep.subr.bf16.mxu0 0
        %630 = vmatpush2.bf16.msra.mxu0 0
        %631 = vmatprep.subr.bf16.mxu0 0
        %632 = vmatpush2.bf16.msra.mxu0 0
        %633 = vmatprep.subr.bf16.mxu0 0
        %634 = vmatpush2.bf16.msra.mxu0 0
        %635 = vmatprep.subr.bf16.mxu0 0
        %636 = vmatpush2.bf16.msra.mxu0 0
        %637 = vmatprep.mubr.bf16.mxu0 0
        %638 = vmatmul.mubr.bf16.gmra.mxu0 %v576
        %v639 = vpop.f32.mrf.mxu0
        %v640 = vadd.f32 %v548, %v639
        %v641 = vpop.f32.mrf.mxu0
        %v642 = vpop.f32.mrf.mxu0
        %v643 = vadd.f32 %v548, %v642
        %v644 = vpop.f32.mrf.mxu0
        %645 = vmatprep.mubr.bf16.mxu0 0
        %646 = vmatmul.mubr.bf16.gmra.mxu0 %v579
        %v647 = vpop.f32.mrf.mxu0
        %v648 = vadd.f32 %v548, %v647
        %v649 = vpop.f32.mrf.mxu0
        %v650 = vpop.f32.mrf.mxu0
        %v651 = vadd.f32 %v548, %v650
        %v652 = vpop.f32.mrf.mxu0
        %653 = vmatprep.mubr.bf16.mxu0 0
        %654 = vmatmul.mubr.bf16.gmra.mxu0 %v582
        %v655 = vpop.f32.mrf.mxu0
        %v656 = vadd.f32 %v548, %v655
        %v657 = vpop.f32.mrf.mxu0
        %v658 = vpop.f32.mrf.mxu0
        %v659 = vadd.f32 %v548, %v658
        %v660 = vpop.f32.mrf.mxu0
        %661 = vmatprep.mubr.bf16.mxu0 0
        %662 = vmatmul.mubr.bf16.gmra.mxu0 %v585
        %v663 = vpop.f32.mrf.mxu0
        %v664 = vadd.f32 %v548, %v663
        %v665 = vpop.f32.mrf.mxu0
        %v666 = vpop.f32.mrf.mxu0
        %v667 = vadd.f32 %v548, %v666
        %v668 = vpop.f32.mrf.mxu0
        %669 = vmatprep.mubr.bf16.mxu0 0
        %670 = vmatmul.mubr.bf16.gmra.mxu0 %v588
        %v671 = vpop.f32.mrf.mxu0
        %v672 = vadd.f32 %v548, %v671
        %v673 = vpop.f32.mrf.mxu0
        %v674 = vpop.f32.mrf.mxu0
        %v675 = vadd.f32 %v548, %v674
        %v676 = vpop.f32.mrf.mxu0
        %677 = vmatprep.mubr.bf16.mxu0 0
        %678 = vmatmul.mubr.bf16.gmra.mxu0 %v591
        %v679 = vpop.f32.mrf.mxu0
        %v680 = vadd.f32 %v548, %v679
        %v681 = vpop.f32.mrf.mxu0
        %v682 = vpop.f32.mrf.mxu0
        %v683 = vadd.f32 %v548, %v682
        %v684 = vpop.f32.mrf.mxu0
        %685 = vmatprep.mubr.bf16.mxu0 0
        %686 = vmatmul.mubr.bf16.gmra.mxu0 %v594
        %v687 = vpop.f32.mrf.mxu0
        %v688 = vadd.f32 %v548, %v687
        %v689 = vpop.f32.mrf.mxu0
        %v690 = vpop.f32.mrf.mxu0
        %v691 = vadd.f32 %v548, %v690
        %v692 = vpop.f32.mrf.mxu0
        %693 = vmatprep.mubr.bf16.mxu0 0
        %694 = vmatmul.mubr.bf16.gmra.mxu0 %v597
        %v695 = vpop.f32.mrf.mxu0
        %v696 = vadd.f32 %v548, %v695
        %v697 = vpop.f32.mrf.mxu0
        %v698 = vpop.f32.mrf.mxu0
        %v699 = vadd.f32 %v548, %v698
        %v700 = vpop.f32.mrf.mxu0
        %701 = vmatprep.mubr.bf16.mxu0 0
        %702 = vmatmul.mubr.bf16.gmra.mxu0 %v600
        %v703 = vpop.f32.mrf.mxu0
        %v704 = vadd.f32 %v548, %v703
        %v705 = vpop.f32.mrf.mxu0
        %v706 = vpop.f32.mrf.mxu0
        %v707 = vadd.f32 %v548, %v706
        %v708 = vpop.f32.mrf.mxu0
        %709 = vmatprep.mubr.bf16.mxu0 0
        %710 = vmatmul.mubr.bf16.gmra.mxu0 %v603
        %v711 = vpop.f32.mrf.mxu0
        %v712 = vadd.f32 %v548, %v711
        %v713 = vpop.f32.mrf.mxu0
        %v714 = vpop.f32.mrf.mxu0
        %v715 = vpop.f32.mrf.mxu0
        %716 = vdwg.mxu0
        %v717 = vmax.f32 %v640, 0.0
        %v718 = vmax.f32 %v643, 0.0
        %v719 = vmax.f32 %v648, 0.0
        %v720 = vmax.f32 %v651, 0.0
        %v721 = vmax.f32 %v656, 0.0
        %v722 = vmax.f32 %v659, 0.0
        %v723 = vmax.f32 %v664, 0.0
        %v724 = vmax.f32 %v667, 0.0
        %v725 = vmax.f32 %v672, 0.0
        %v726 = vmax.f32 %v675, 0.0
        %v727 = vmax.f32 %v680, 0.0
        %v728 = vmax.f32 %v683, 0.0
        %v729 = vmax.f32 %v688, 0.0
        %v730 = vmax.f32 %v691, 0.0
        %v731 = vmax.f32 %v696, 0.0
        %v732 = vmax.f32 %v699, 0.0
        %v733 = vmax.f32 %v704, 0.0
        %v734 = vmax.f32 %v707, 0.0
        %v735 = vmax.f32 %v712, 0.0
        %v736 = vpack.c.bf16 %v718, %v717
        %v737 = vpack.c.bf16 %v720, %v719
        %v738 = vpack.c.bf16 %v722, %v721
        %v739 = vpack.c.bf16 %v724, %v723
        %v740 = vpack.c.bf16 %v726, %v725
        %v741 = vpack.c.bf16 %v728, %v727
        %v742 = vpack.c.bf16 %v730, %v729
        %v743 = vpack.c.bf16 %v732, %v731
        %v744 = vpack.c.bf16 %v734, %v733
        %v745 = vpack.c.bf16 %v735, %v735
        %v746 = vld [vmem:[%s5] sm:$0xf]
        %v747 = vld [vmem:[%s5 + $0x4] sm:$0xf]
        %v748 = vld [vmem:[%s5 + $0x8] sm:$0xf]
        %v749 = vld [vmem:[%s5 + $0xc] sm:$0xf]
        %v750 = vld [vmem:[%s5 + $0x10] sm:$0xf]
        %v751 = vld [vmem:[%s5 + $0x14] sm:$0xf]
        %v752 = vld [vmem:[%s5 + $0x18] sm:$0xf]
        %v753 = vld [vmem:[%s5 + $0x1c] sm:$0xf]
        %v754 = vld [vmem:[%s5 + $0x20] sm:$0xf]
        %v755 = vld [vmem:[%s5 + $0x24] sm:$0xf]
        %v756 = vld [vmem:[%s5 + $0x28] sm:$0xf]
        %v757 = vld [vmem:[%s5 + $0x2c] sm:$0xf]
        %v758 = vld [vmem:[%s5 + $0x30] sm:$0xf]
        %v759 = vld [vmem:[%s5 + $0x34] sm:$0xf]
        %v760 = vld [vmem:[%s5 + $0x38] sm:$0xf]
        %v761 = vld [vmem:[%s5 + $0x3c] sm:$0xf]
        %v762 = vld [vmem:[%s6] sm:$0x1]
        %v764 = vlaneseq
        %v765 = vshrl.u32 %v764, 7
        %v766 = vsub.s32 0, %v765
        %v767 = vrot.slane %v762, %v766
        %v785 = vunpack.c.l.b16 %v746
        %v786 = vunpack.c.l.b16 %v747
        %v787 = vunpack.c.l.b16 %v748
        %v788 = vunpack.c.l.b16 %v749
        %v789 = vunpack.c.l.b16 %v750
        %v790 = vunpack.c.l.b16 %v751
        %v791 = vunpack.c.l.b16 %v752
        %v792 = vunpack.c.l.b16 %v753
        %v793 = vunpack.c.l.b16 %v754
        %v794 = vunpack.c.l.b16 %v755
        %v795 = vunpack.c.l.b16 %v756
        %v796 = vunpack.c.l.b16 %v757
        %v797 = vunpack.c.l.b16 %v758
        %v798 = vunpack.c.l.b16 %v759
        %v799 = vunpack.c.l.b16 %v760
        %v800 = vunpack.c.l.b16 %v761
        %v801 = vpack.c.b16 %v786, %v785
        %v802 = vpack.c.b16 %v788, %v787
        %v803 = vpack.c.b16 %v790, %v789
        %v804 = vpack.c.b16 %v792, %v791
        %v805 = vpack.c.b16 %v794, %v793
        %v806 = vpack.c.b16 %v796, %v795
        %v807 = vpack.c.b16 %v798, %v797
        %v808 = vpack.c.b16 %v800, %v799
        %817 = vmatprep.subr.bf16.mxu0 0
        %818 = vmatpush1.bf16.msra.mxu0 %v808
        %819 = vmatprep.subr.bf16.mxu0 0
        %820 = vmatpush1.bf16.msra.mxu0 %v807
        %821 = vmatprep.subr.bf16.mxu0 0
        %822 = vmatpush1.bf16.msra.mxu0 %v806
        %823 = vmatprep.subr.bf16.mxu0 0
        %824 = vmatpush1.bf16.msra.mxu0 %v805
        %825 = vmatprep.subr.bf16.mxu0 0
        %826 = vmatpush1.bf16.msra.mxu0 %v804
        %827 = vmatprep.subr.bf16.mxu0 0
        %828 = vmatpush1.bf16.msra.mxu0 %v803
        %829 = vmatprep.subr.bf16.mxu0 0
        %830 = vmatpush1.bf16.msra.mxu0 %v802
        %831 = vmatprep.subr.bf16.mxu0 0
        %832 = vmatpush1.bf16.msra.mxu0 %v801
        %833 = vmatprep.subr.bf16.mxu0 0
        %834 = vmatpush2.bf16.msra.mxu0 0
        %835 = vmatprep.subr.bf16.mxu0 0
        %836 = vmatpush2.bf16.msra.mxu0 0
        %837 = vmatprep.subr.bf16.mxu0 0
        %838 = vmatpush2.bf16.msra.mxu0 0
        %839 = vmatprep.subr.bf16.mxu0 0
        %840 = vmatpush2.bf16.msra.mxu0 0
        %841 = vmatprep.subr.bf16.mxu0 0
        %842 = vmatpush2.bf16.msra.mxu0 0
        %843 = vmatprep.subr.bf16.mxu0 0
        %844 = vmatpush2.bf16.msra.mxu0 0
        %845 = vmatprep.subr.bf16.mxu0 0
        %846 = vmatpush2.bf16.msra.mxu0 0
        %847 = vmatprep.subr.bf16.mxu0 0
        %848 = vmatpush2.bf16.msra.mxu0 0
        %849 = vmatprep.mubr.bf16.mxu0 0
        %850 = vmatmul.mubr.bf16.gmra.mxu0 %v736
        %v851 = vpop.f32.mrf.mxu0
        %v852 = vadd.f32 %v767, %v851
        %v853 = vpop.f32.mrf.mxu0
        %v854 = vpop.f32.mrf.mxu0
        %v855 = vadd.f32 %v767, %v854
        %v856 = vpop.f32.mrf.mxu0
        %857 = vmatprep.mubr.bf16.mxu0 0
        %858 = vmatmul.mubr.bf16.gmra.mxu0 %v737
        %v859 = vpop.f32.mrf.mxu0
        %v860 = vadd.f32 %v767, %v859
        %v861 = vpop.f32.mrf.mxu0
        %v862 = vpop.f32.mrf.mxu0
        %v863 = vadd.f32 %v767, %v862
        %v864 = vpop.f32.mrf.mxu0
        %865 = vmatprep.mubr.bf16.mxu0 0
        %866 = vmatmul.mubr.bf16.gmra.mxu0 %v738
        %v867 = vpop.f32.mrf.mxu0
        %v868 = vadd.f32 %v767, %v867
        %v869 = vpop.f32.mrf.mxu0
        %v870 = vpop.f32.mrf.mxu0
        %v871 = vadd.f32 %v767, %v870
        %v872 = vpop.f32.mrf.mxu0
        %873 = vmatprep.mubr.bf16.mxu0 0
        %874 = vmatmul.mubr.bf16.gmra.mxu0 %v739
        %v875 = vpop.f32.mrf.mxu0
        %v876 = vadd.f32 %v767, %v875
        %v877 = vpop.f32.mrf.mxu0
        %v878 = vpop.f32.mrf.mxu0
        %v879 = vadd.f32 %v767, %v878
        %v880 = vpop.f32.mrf.mxu0
        %881 = vmatprep.mubr.bf16.mxu0 0
        %882 = vmatmul.mubr.bf16.gmra.mxu0 %v740
        %v883 = vpop.f32.mrf.mxu0
        %v884 = vadd.f32 %v767, %v883
        %v885 = vpop.f32.mrf.mxu0
        %v886 = vpop.f32.mrf.mxu0
        %v887 = vadd.f32 %v767, %v886
        %v888 = vpop.f32.mrf.mxu0
        %889 = vmatprep.mubr.bf16.mxu0 0
        %890 = vmatmul.mubr.bf16.gmra.mxu0 %v741
        %v891 = vpop.f32.mrf.mxu0
        %v892 = vadd.f32 %v767, %v891
        %v893 = vpop.f32.mrf.mxu0
        %v894 = vpop.f32.mrf.mxu0
        %v895 = vadd.f32 %v767, %v894
        %v896 = vpop.f32.mrf.mxu0
        %897 = vmatprep.mubr.bf16.mxu0 0
        %898 = vmatmul.mubr.bf16.gmra.mxu0 %v742
        %v899 = vpop.f32.mrf.mxu0
        %v900 = vadd.f32 %v767, %v899
        %v901 = vpop.f32.mrf.mxu0
        %v902 = vpop.f32.mrf.mxu0
        %v903 = vadd.f32 %v767, %v902
        %v904 = vpop.f32.mrf.mxu0
        %905 = vmatprep.mubr.bf16.mxu0 0
        %906 = vmatmul.mubr.bf16.gmra.mxu0 %v743
        %v907 = vpop.f32.mrf.mxu0
        %v908 = vadd.f32 %v767, %v907
        %v909 = vpop.f32.mrf.mxu0
        %v910 = vpop.f32.mrf.mxu0
        %v911 = vadd.f32 %v767, %v910
        %v912 = vpop.f32.mrf.mxu0
        %913 = vmatprep.mubr.bf16.mxu0 0
        %914 = vmatmul.mubr.bf16.gmra.mxu0 %v744
        %v915 = vpop.f32.mrf.mxu0
        %v916 = vadd.f32 %v767, %v915
        %v917 = vpop.f32.mrf.mxu0
        %v918 = vpop.f32.mrf.mxu0
        %v919 = vadd.f32 %v767, %v918
        %v920 = vpop.f32.mrf.mxu0
        %921 = vmatprep.mubr.bf16.mxu0 0
        %922 = vmatmul.mubr.bf16.gmra.mxu0 %v745
        %v923 = vpop.f32.mrf.mxu0
        %v924 = vadd.f32 %v767, %v923
        %v925 = vpop.f32.mrf.mxu0
        %v926 = vpop.f32.mrf.mxu0
        %v927 = vpop.f32.mrf.mxu0
        %928 = vdwg.mxu0
        %v929 = vmax.f32 %v852, 0.0
        %v930 = vmax.f32 %v855, 0.0
        %v931 = vmax.f32 %v860, 0.0
        %v932 = vmax.f32 %v863, 0.0
        %v933 = vmax.f32 %v868, 0.0
        %v934 = vmax.f32 %v871, 0.0
        %v935 = vmax.f32 %v876, 0.0
        %v936 = vmax.f32 %v879, 0.0
        %v937 = vmax.f32 %v884, 0.0
        %v938 = vmax.f32 %v887, 0.0
        %v939 = vmax.f32 %v892, 0.0
        %v940 = vmax.f32 %v895, 0.0
        %v941 = vmax.f32 %v900, 0.0
        %v942 = vmax.f32 %v903, 0.0
        %v943 = vmax.f32 %v908, 0.0
        %v944 = vmax.f32 %v911, 0.0
        %v945 = vmax.f32 %v916, 0.0
        %v946 = vmax.f32 %v919, 0.0
        %v947 = vmax.f32 %v924, 0.0
        %948 = vst [vmem:[%s272] sm:$0xff] %v929
        %949 = vst [vmem:[%s272 + $0x8] sm:$0xff] %v930
        %950 = vst [vmem:[%s272 + $0x10] sm:$0xff] %v931
        %951 = vst [vmem:[%s272 + $0x18] sm:$0xff] %v932
        %952 = vst [vmem:[%s272 + $0x20] sm:$0xff] %v933
        %953 = vst [vmem:[%s272 + $0x28] sm:$0xff] %v934
        %954 = vst [vmem:[%s272 + $0x30] sm:$0xff] %v935
        %955 = vst [vmem:[%s272 + $0x38] sm:$0xff] %v936
        %956 = vst [vmem:[%s272 + $0x40] sm:$0xff] %v937
        %957 = vst [vmem:[%s272 + $0x48] sm:$0xff] %v938
        %958 = vst [vmem:[%s272 + $0x50] sm:$0xff] %v939
        %959 = vst [vmem:[%s272 + $0x58] sm:$0xff] %v940
        %960 = vst [vmem:[%s272 + $0x60] sm:$0xff] %v941
        %961 = vst [vmem:[%s272 + $0x68] sm:$0xff] %v942
        %962 = vst [vmem:[%s272 + $0x70] sm:$0xff] %v943
        %963 = vst [vmem:[%s272 + $0x78] sm:$0xff] %v944
        %964 = vst [vmem:[%s272 + $0x80] sm:$0xff] %v945
        %965 = vst [vmem:[%s272 + $0x88] sm:$0xff] %v946
        %966 = vst [vmem:[%s272 + $0x90] sm:$0xff] %v947
        %s967 = sand.u32 %s181, 1
        %s968 = scalar_lea.sflag [#allocation3], %s967
        %s969 = sand.u32 %s181, 1
        %s970 = smul.addr %s969, 152
        %s971 = scalar_lea.vmem [#allocation2], %s970
        // Predicated region
        $region49: #{tpu_custom_call.1} parent=47 // pred_check
          %p972 = pneg %p191
        $region50: #{tpu_custom_call.1} parent=47 // pred_check_branch
          %974 = sbr.rel (%p972) target = $region52
        $region51: #{tpu_custom_call.1} parent=47 // pred_region
          %s975 = smul.u32 19, %s21
          %s977 = ssub.s32 2432, 2432
          %978 = vsyncadd %s968, %s977
          %s979 = smul.addr %s975, 128
          %s980 = scalar_lea.hbm %s7, %s979
          %s981 = sshll.u32 %s971, 4
          %s982 = int_to_ptr.vmem [resolvable:$true] %s981
          %987 = dma.vmem_to_hbm [thread:$0]  %s982, 2432, %s980, %s968, 128, 128, 8
        $region52: #{tpu_custom_call.1} parent=47 // pred_fallthru
          _
      $region48: #{tpu_custom_call.1} parent=5 // pred_fallthru
        _
      %p988 = scmp.le.s32.totalorder 2, %s16
      // Predicated region
      $region53: #{tpu_custom_call.1} parent=5 // pred_check
        %p989 = pneg %p988
      $region54: #{tpu_custom_call.1} parent=5 // pred_check_branch
        %991 = sbr.rel (%p989) target = $region56
      $region55: #{tpu_custom_call.1} parent=5 // pred_region
        %s992 = ssub.s32 %s16, 2
        // Predicated region
        $region57: #{tpu_custom_call.1} parent=55 // pred_check
          %p993 = pneg %p197
        $region58: #{tpu_custom_call.1} parent=55 // pred_check_branch
          %995 = sbr.rel (%p993) target = $region60
        $region59: #{tpu_custom_call.1} parent=55 // pred_region
          %s996 = sand.u32 %s182, 1
          %s997 = scalar_lea.sflag [#allocation3], %s996
          %s998 = sand.u32 %s182, 1
          %s999 = smul.addr %s998, 152
          %s1000 = scalar_lea.vmem [#allocation2], %s999
          %1001 = dma.done %s997, 2432
        $region60: #{tpu_custom_call.1} parent=55 // pred_fallthru
          _
      $region56: #{tpu_custom_call.1} parent=5 // pred_fallthru
        _
    $region6: #{tpu_custom_call.1} parent=1 // loop_footer
      %s20 = sadd.s32 1, %s16
    $region7: #{tpu_custom_call.1} parent=1 // loop_footer_branch
      %15 = sbr.rel target = $region3
    $region8: #{tpu_custom_call.1} parent=1 // loop_exit
      _
    %1002 = vsyncpa [#allocation3], 1
    %s1003 = scalar_lea.sflag [#allocation3], 1
    %1004 = vsyncpa %s1003, 1

</llo_original>
